<compile_context>
chip_gen: v7x
topology: tpu7x:2x2x1
jax: 0.10.0
libtpu: 0.0.40
codegen_flags: <defaults>
</compile_context>

<pallas_src>
import math

import jax
import jax.numpy as jnp
from jax.experimental import pallas as pl
from jax.experimental.pallas import tpu as pltpu


def _round_up(n, m):
    return ((n + m - 1) // m) * m


def _ensemble_mlp_kernel(x_ref, w1_ref, w2_ref, aux_ref, o_ref):
    # x_ref  : (tile_B, d_in)            current batch tile (shared by members)
    # w1_ref : (d_in, E*H)   if layer-1 is fused across members (H % 128 == 0)
    #          (E, d_in, H)  otherwise
    # w2_ref : (E, H, H)
    # aux_ref: (E, 4, H) f32  rows = [b1, b2, w3^T, b3 in lane 0 (rest 0)]
    # o_ref  : (E, tile_B)    lane-dense Q values
    E = w2_ref.shape[0]
    H = w2_ref.shape[1]
    fused_l1 = len(w1_ref.shape) == 2

    x = x_ref[...]
    if fused_l1:
        # One MXU pass for both members: K = d_in is tiny, so doubling N
        # amortizes MXU fill/drain and halves the vmatmul pushes for layer 1.
        h1_all = jnp.dot(x, w1_ref[...], preferred_element_type=jnp.float32)

    for e in range(E):                      # static unroll over the ensemble
        aux = aux_ref[e]                    # (4, H), f32

        if fused_l1:
            h1 = h1_all[:, e * H:(e + 1) * H]        # lane-aligned slice
        else:
            h1 = jnp.dot(x, w1_ref[e], preferred_element_type=jnp.float32)
        h1 = jnp.maximum(h1 + aux[0:1, :], 0.0).astype(w2_ref.dtype)

        h2 = jnp.dot(h1, w2_ref[e], preferred_element_type=jnp.float32)
        h2 = jnp.maximum(h2 + aux[1:2, :], 0.0)

        # Final layer (H -> 1): VPU multiply + lane reduce instead of an N=1
        # MXU pass (which would use <1% of the MXU and still pay fill/drain).
        q = jnp.sum(h2 * aux[2:3, :], axis=-1, keepdims=True)     # (tile, 1)
        q = q + aux[3:4, 0:1]                                     # + b3
        o_ref[e, :] = q[:, 0].astype(o_ref.dtype)                 # lane-dense row


def ensemble_critic_forward(x, params, *, tile_b=1024,
                            compute_dtype=jnp.bfloat16):
    """x: (B, state_dim + action_dim) -> (E, B, 1) float32.

    Equivalent to torch.stack([qnet(x) for qnet in ensemble_q]).
    MXU operands are cast to `compute_dtype` (bf16 by default); accumulation,
    biases and the final head stay in f32.
    """
    w1, b1, w2, b2, w3, b3 = params
    E, d_in, H = w1.shape
    B = x.shape[0]

    # Pack per-member small tensors into one f32 (E, 4, H) slab:
    #   row 0: b1   row 1: b2   row 2: w3^T   row 3: [b3, 0, ..., 0]
    w3_row = jnp.swapaxes(w3, 1, 2)                                   # (E, 1, H)
    b3_row = jnp.pad(b3.reshape(E, 1, 1), ((0, 0), (0, 0), (0, H - 1)))
    aux_c = jnp.concatenate(
        [b1.reshape(E, 1, H), b2.reshape(E, 1, H), w3_row, b3_row],
        axis=1).astype(jnp.float32)

    x_c = x.astype(compute_dtype)
    w2_c = w2.astype(compute_dtype)

    fuse_l1 = (H % 128) == 0
    if fuse_l1:
        # (E, d_in, H) -> (d_in, E*H): one layer-1 matmul for both members.
        w1_c = jnp.transpose(w1, (1, 0, 2)).reshape(d_in, E * H)
        w1_c = w1_c.astype(compute_dtype)
        w1_block, w1_map = (d_in, E * H), (lambda i: (0, 0))
    else:
        w1_c = w1.astype(compute_dtype)
        w1_block, w1_map = (E, d_in, H), (lambda i: (0, 0, 0))

    # Batch tiling: single tile for small B; otherwise 128-aligned tiles and
    # >= 2 grid steps so under "parallel" semantics v7x's second TC has work.
    if B > 256:
        half = _round_up(-(-B // 2), 128)
        tile = min(_round_up(tile_b, 128), half)
    else:
        tile = max(8, _round_up(B, 8))
    Bp = _round_up(B, tile)
    if Bp != B:
        x_c = jnp.pad(x_c, ((0, Bp - B), (0, 0)))
    grid = (Bp // tile,)

    # Explicit VMEM budget (v7x: 64 MiB physical / 32 MiB scoped default).
    itemsize = jnp.dtype(compute_dtype).itemsize
    weight_bytes = (E * d_in * H + E * H * H) * itemsize + E * 4 * H * 4
    act_bytes = (2 * tile * d_in * itemsize          # x, double-buffered
                 + 2 * E * tile * 4                  # out, double-buffered
                 + 3 * tile * max(E * H, H) * 4)     # h1_all / h1 / h2 temps
    vmem_limit = int(max(32 << 20, min(48 << 20, 2 * (weight_bytes + act_bytes))))

    out_shape = jax.ShapeDtypeStruct((E, Bp), jnp.float32)

    def call(weight_mode):
        extra = {} if weight_mode is None else {"pipeline_mode": weight_mode}
        return pl.pallas_call(
            _ensemble_mlp_kernel,
            out_shape=out_shape,
            grid_spec=pltpu.PrefetchScalarGridSpec(
                num_scalar_prefetch=0,
                grid=grid,
                in_specs=[
                    pl.BlockSpec((tile, d_in), lambda i: (i, 0)),            # x
                    pl.BlockSpec(w1_block, w1_map, **extra),                 # W1
                    pl.BlockSpec((E, H, H), lambda i: (0, 0, 0), **extra),   # W2
                    pl.BlockSpec((E, 4, H), lambda i: (0, 0, 0), **extra),   # aux
                ],
                out_specs=pl.BlockSpec((E, tile), lambda i: (0, i)),  # lane-dense q
            ),
            compiler_params=pltpu.CompilerParams(
                dimension_semantics=("parallel",),
                vmem_limit_bytes=vmem_limit),
        )(x_c, w1_c, w2_c, aux_c)

    try:
        # Grid-invariant weights: single-buffer them (constant index_map).
        out = call(pl.Buffered(1))
    except Exception:
        # TODO(synk): pipeline_mode=pl.Buffered(1) rejected by this jax/Mosaic
        # version; fall back to default double-buffered weight specs.
        out = call(None)

    return out[:, :B].reshape(E, B, 1)


def init_ensemble_params(key, state_dim, action_dim, ensemble_num=2,
                         hidden_dim=256, hidden_layer=2):
    """Deterministic init mimicking nn.Linear default (U[-1/sqrt(fan_in), ...])."""
    assert hidden_layer == 2, "kernel is written for hidden_depth == 2"
    d_in = state_dim + action_dim
    E, H = ensemble_num, hidden_dim

    def uniform(k, shape, fan_in):
        bound = 1.0 / math.sqrt(fan_in)
        return jax.random.uniform(k, shape, jnp.float32, -bound, bound)

    ks = jax.random.split(key, 6)
    w1 = uniform(ks[0], (E, d_in, H), d_in)
    b1 = uniform(ks[1], (E, H), d_in)
    w2 = uniform(ks[2], (E, H, H), H)
    b2 = uniform(ks[3], (E, H), H)
    w3 = uniform(ks[4], (E, H, 1), H)
    b3 = uniform(ks[5], (E, 1), H)
    return (w1, b1, w2, b2, w3, b3)


def ensemble_critic_ref(x, params):
    """Pure-JAX reference (matches the PyTorch forward)."""
    w1, b1, w2, b2, w3, b3 = params
    outs = []
    for e in range(w1.shape[0]):
        h1 = jnp.maximum(x @ w1[e] + b1[e], 0.0)
        h2 = jnp.maximum(h1 @ w2[e] + b2[e], 0.0)
        outs.append(h2 @ w3[e] + b3[e])
    return jnp.stack(outs)


if __name__ == "__main__":
    key = jax.random.PRNGKey(0)
    k_param_a, k_param_b, k_x = jax.random.split(key, 3)

    state_dim, action_dim = 12, 4
    ensemble_num = 2

    # Config A: H=128 (lane-aligned -> fused layer-1 path), small batch.
    batch = 8
    params_a = init_ensemble_params(k_param_a, state_dim, action_dim,
                                    ensemble_num=ensemble_num, hidden_dim=128)
    x = jax.random.normal(k_x, (batch, state_dim + action_dim), jnp.float32)
    ref_a = ensemble_critic_ref(x, params_a)

    out_f32 = jax.block_until_ready(
        ensemble_critic_forward(x, params_a, compute_dtype=jnp.float32))
    assert out_f32.shape == (ensemble_num, batch, 1), out_f32.shape
    assert jnp.allclose(out_f32, ref_a, atol=1e-4, rtol=1e-4), "f32 mismatch"

    # Same config, default bf16 MXU operands (f32 accumulation): loose check.
    out_bf16 = jax.block_until_ready(ensemble_critic_forward(x, params_a))
    assert out_bf16.shape == (ensemble_num, batch, 1), out_bf16.shape
    assert jnp.allclose(out_bf16, ref_a, atol=5e-2, rtol=5e-2), "bf16 mismatch"

    # Config B: H=32 (per-member layer-1 fallback) with a batch large enough
    # to exercise the multi-tile grid and padded-row slicing.
    batch_b = 300
    params_b = init_ensemble_params(k_param_b, state_dim, action_dim,
                                    ensemble_num=ensemble_num, hidden_dim=32)
    x_big = jax.random.normal(k_x, (batch_b, state_dim + action_dim),
                              jnp.float32)
    ref_b = ensemble_critic_ref(x_big, params_b)
    out_b = jax.block_until_ready(
        ensemble_critic_forward(x_big, params_b, compute_dtype=jnp.float32))
    assert out_b.shape == (ensemble_num, batch_b, 1), out_b.shape
    assert jnp.allclose(out_b, ref_b, atol=1e-4, rtol=1e-4), "tiled mismatch"

    print("KERNEL_OK")
</pallas_src>

<mosaic_0001>
module attributes {stable_mosaic.version = 11 : i64} {
  func.func @_ensemble_mlp_kernel(%arg0: i32, %arg1: memref<8x16xf32, #tpu.memory_space<vmem>>, %arg2: memref<16x256xf32, #tpu.memory_space<vmem>>, %arg3: memref<2x128x128xf32, #tpu.memory_space<vmem>>, %arg4: memref<2x4x128xf32, #tpu.memory_space<vmem>>, %arg5: memref<2x8xf32, #tpu.memory_space<vmem>>) attributes {dimension_semantics = [#tpu.dimension_semantics<parallel>], iteration_bounds = array<i64: 1>, scalar_prefetch = 0 : i64, scratch_operands = 0 : i64, tpu.core_type = #tpu.core_type<tc>, window_params = [{transform_indices = @transform_0, window_bounds = array<i64: 8, 16>}, {pipeline_mode = #tpu.pipeline_mode<synchronous>, transform_indices = @transform_1, window_bounds = array<i64: 16, 256>}, {pipeline_mode = #tpu.pipeline_mode<synchronous>, transform_indices = @transform_2, window_bounds = array<i64: 2, 128, 128>}, {pipeline_mode = #tpu.pipeline_mode<synchronous>, transform_indices = @transform_3, window_bounds = array<i64: 2, 4, 128>}, {transform_indices = @transform_4, window_bounds = array<i64: 2, 8>}]} {
    %c0 = arith.constant 0 : index
    %c0_0 = arith.constant 0 : index
    %0 = vector.load %arg1[%c0, %c0_0] : memref<8x16xf32, #tpu.memory_space<vmem>>, vector<8x16xf32>
    %c0_1 = arith.constant 0 : index
    %c0_2 = arith.constant 0 : index
    %1 = vector.load %arg2[%c0_1, %c0_2] : memref<16x256xf32, #tpu.memory_space<vmem>>, vector<16x256xf32>
    %cst = arith.constant dense<0.000000e+00> : vector<8x256xf32>
    %2 = tpu.matmul %0, %1, %cst {dimension_numbers = #tpu.dot_dimension_numbers<[1], [0], [0], [1], [0, 0, 1, 1], [], []>} : vector<8x16xf32>, vector<16x256xf32>, vector<8x256xf32> -> vector<8x256xf32>
    %c0_3 = arith.constant 0 : index
    %c0_4 = arith.constant 0 : index
    %c0_5 = arith.constant 0 : index
    %3 = vector.load %arg4[%c0_3, %c0_4, %c0_5] : memref<2x4x128xf32, #tpu.memory_space<vmem>>, vector<1x4x128xf32>
    %4 = vector.shape_cast %3 : vector<1x4x128xf32> to vector<4x128xf32>
    %5 = vector.extract_strided_slice %2 {offsets = [0, 0], sizes = [8, 128], strides = [1, 1]} : vector<8x256xf32> to vector<8x128xf32>
    %6 = vector.extract_strided_slice %4 {offsets = [0, 0], sizes = [1, 128], strides = [1, 1]} : vector<4x128xf32> to vector<1x128xf32>
    %7 = vector.broadcast %6 : vector<1x128xf32> to vector<8x128xf32>
    %8 = arith.addf %5, %7 : vector<8x128xf32>
    %cst_6 = arith.constant 0.000000e+00 : f32
    %9 = vector.broadcast %cst_6 : f32 to vector<8x128xf32>
    %10 = arith.maximumf %8, %9 : vector<8x128xf32>
    %c0_7 = arith.constant 0 : index
    %c0_8 = arith.constant 0 : index
    %c0_9 = arith.constant 0 : index
    %11 = vector.load %arg3[%c0_7, %c0_8, %c0_9] : memref<2x128x128xf32, #tpu.memory_space<vmem>>, vector<1x128x128xf32>
    %12 = vector.shape_cast %11 : vector<1x128x128xf32> to vector<128x128xf32>
    %cst_10 = arith.constant dense<0.000000e+00> : vector<8x128xf32>
    %13 = tpu.matmul %10, %12, %cst_10 {dimension_numbers = #tpu.dot_dimension_numbers<[1], [0], [0], [1], [0, 0, 1, 1], [], []>} : vector<8x128xf32>, vector<128x128xf32>, vector<8x128xf32> -> vector<8x128xf32>
    %14 = vector.extract_strided_slice %4 {offsets = [1, 0], sizes = [1, 128], strides = [1, 1]} : vector<4x128xf32> to vector<1x128xf32>
    %15 = vector.broadcast %14 : vector<1x128xf32> to vector<8x128xf32>
    %16 = arith.addf %13, %15 : vector<8x128xf32>
    %cst_11 = arith.constant 0.000000e+00 : f32
    %17 = vector.broadcast %cst_11 : f32 to vector<8x128xf32>
    %18 = arith.maximumf %16, %17 : vector<8x128xf32>
    %19 = vector.extract_strided_slice %4 {offsets = [2, 0], sizes = [1, 128], strides = [1, 1]} : vector<4x128xf32> to vector<1x128xf32>
    %20 = vector.broadcast %19 : vector<1x128xf32> to vector<8x128xf32>
    %21 = arith.mulf %18, %20 : vector<8x128xf32>
    %cst_12 = arith.constant dense<0.000000e+00> : vector<8xf32>
    %22 = vector.multi_reduction <add>, %21, %cst_12 [1] : vector<8x128xf32> to vector<8xf32>
    %23 = vector.shape_cast %22 : vector<8xf32> to vector<8x1xf32>
    %24 = vector.extract_strided_slice %4 {offsets = [3, 0], sizes = [1, 1], strides = [1, 1]} : vector<4x128xf32> to vector<1x1xf32>
    %25 = vector.broadcast %24 : vector<1x1xf32> to vector<8x1xf32>
    %26 = arith.addf %23, %25 : vector<8x1xf32>
    %27 = vector.shape_cast %26 : vector<8x1xf32> to vector<8xf32>
    %c0_13 = arith.constant 0 : index
    %c0_14 = arith.constant 0 : index
    %28 = vector.load %arg5[%c0_13, %c0_14] : memref<2x8xf32, #tpu.memory_space<vmem>>, vector<1x8xf32>
    %29 = vector.shape_cast %28 : vector<1x8xf32> to vector<8xf32>
    %30 = vector.shape_cast %27 : vector<8xf32> to vector<1x8xf32>
    tpu.vector_store %arg5[%c0_13, %c0_14], %30 {strides = array<i32>} : memref<2x8xf32, #tpu.memory_space<vmem>>, vector<1x8xf32>,
    %c1 = arith.constant 1 : index
    %c0_15 = arith.constant 0 : index
    %c0_16 = arith.constant 0 : index
    %31 = vector.load %arg4[%c1, %c0_15, %c0_16] : memref<2x4x128xf32, #tpu.memory_space<vmem>>, vector<1x4x128xf32>
    %32 = vector.shape_cast %31 : vector<1x4x128xf32> to vector<4x128xf32>
    %33 = vector.extract_strided_slice %2 {offsets = [0, 128], sizes = [8, 128], strides = [1, 1]} : vector<8x256xf32> to vector<8x128xf32>
    %34 = vector.extract_strided_slice %32 {offsets = [0, 0], sizes = [1, 128], strides = [1, 1]} : vector<4x128xf32> to vector<1x128xf32>
    %35 = vector.broadcast %34 : vector<1x128xf32> to vector<8x128xf32>
    %36 = arith.addf %33, %35 : vector<8x128xf32>
    %cst_17 = arith.constant 0.000000e+00 : f32
    %37 = vector.broadcast %cst_17 : f32 to vector<8x128xf32>
    %38 = arith.maximumf %36, %37 : vector<8x128xf32>
    %c1_18 = arith.constant 1 : index
    %c0_19 = arith.constant 0 : index
    %c0_20 = arith.constant 0 : index
    %39 = vector.load %arg3[%c1_18, %c0_19, %c0_20] : memref<2x128x128xf32, #tpu.memory_space<vmem>>, vector<1x128x128xf32>
    %40 = vector.shape_cast %39 : vector<1x128x128xf32> to vector<128x128xf32>
    %cst_21 = arith.constant dense<0.000000e+00> : vector<8x128xf32>
    %41 = tpu.matmul %38, %40, %cst_21 {dimension_numbers = #tpu.dot_dimension_numbers<[1], [0], [0], [1], [0, 0, 1, 1], [], []>} : vector<8x128xf32>, vector<128x128xf32>, vector<8x128xf32> -> vector<8x128xf32>
    %42 = vector.extract_strided_slice %32 {offsets = [1, 0], sizes = [1, 128], strides = [1, 1]} : vector<4x128xf32> to vector<1x128xf32>
    %43 = vector.broadcast %42 : vector<1x128xf32> to vector<8x128xf32>
    %44 = arith.addf %41, %43 : vector<8x128xf32>
    %cst_22 = arith.constant 0.000000e+00 : f32
    %45 = vector.broadcast %cst_22 : f32 to vector<8x128xf32>
    %46 = arith.maximumf %44, %45 : vector<8x128xf32>
    %47 = vector.extract_strided_slice %32 {offsets = [2, 0], sizes = [1, 128], strides = [1, 1]} : vector<4x128xf32> to vector<1x128xf32>
    %48 = vector.broadcast %47 : vector<1x128xf32> to vector<8x128xf32>
    %49 = arith.mulf %46, %48 : vector<8x128xf32>
    %cst_23 = arith.constant dense<0.000000e+00> : vector<8xf32>
    %50 = vector.multi_reduction <add>, %49, %cst_23 [1] : vector<8x128xf32> to vector<8xf32>
    %51 = vector.shape_cast %50 : vector<8xf32> to vector<8x1xf32>
    %52 = vector.extract_strided_slice %32 {offsets = [3, 0], sizes = [1, 1], strides = [1, 1]} : vector<4x128xf32> to vector<1x1xf32>
    %53 = vector.broadcast %52 : vector<1x1xf32> to vector<8x1xf32>
    %54 = arith.addf %51, %53 : vector<8x1xf32>
    %55 = vector.shape_cast %54 : vector<8x1xf32> to vector<8xf32>
    %c1_24 = arith.constant 1 : index
    %c0_25 = arith.constant 0 : index
    %56 = vector.load %arg5[%c1_24, %c0_25] : memref<2x8xf32, #tpu.memory_space<vmem>>, vector<1x8xf32>
    %57 = vector.shape_cast %56 : vector<1x8xf32> to vector<8xf32>
    %58 = vector.shape_cast %55 : vector<8xf32> to vector<1x8xf32>
    tpu.vector_store %arg5[%c1_24, %c0_25], %58 {strides = array<i32>} : memref<2x8xf32, #tpu.memory_space<vmem>>, vector<1x8xf32>,
    return
  }
  func.func @transform_0(%arg0: i32) -> (i32, i32) {
    %c0_i32 = arith.constant 0 : i32
    %c0_i32_0 = arith.constant 0 : i32
    return %arg0, %c0_i32 : i32, i32
  }
  func.func @transform_1(%arg0: i32) -> (i32, i32) {
    %c0_i32 = arith.constant 0 : i32
    %c0_i32_0 = arith.constant 0 : i32
    %c0_i32_1 = arith.constant 0 : i32
    return %c0_i32, %c0_i32_0 : i32, i32
  }
  func.func @transform_2(%arg0: i32) -> (i32, i32, i32) {
    %c0_i32 = arith.constant 0 : i32
    %c0_i32_0 = arith.constant 0 : i32
    %c0_i32_1 = arith.constant 0 : i32
    %c0_i32_2 = arith.constant 0 : i32
    return %c0_i32, %c0_i32_0, %c0_i32_1 : i32, i32, i32
  }
  func.func @transform_3(%arg0: i32) -> (i32, i32, i32) {
    %c0_i32 = arith.constant 0 : i32
    %c0_i32_0 = arith.constant 0 : i32
    %c0_i32_1 = arith.constant 0 : i32
    %c0_i32_2 = arith.constant 0 : i32
    return %c0_i32, %c0_i32_0, %c0_i32_1 : i32, i32, i32
  }
  func.func @transform_4(%arg0: i32) -> (i32, i32) {
    %c0_i32 = arith.constant 0 : i32
    %c0_i32_0 = arith.constant 0 : i32
    return %c0_i32, %arg0 : i32, i32
  }
}

module attributes {stable_mosaic.version = 11 : i64} {
  func.func @_ensemble_mlp_kernel(%arg0: i32, %arg1: memref<8x16xf32, #tpu.memory_space<vmem>>, %arg2: memref<16x256xf32, #tpu.memory_space<vmem>>, %arg3: memref<2x128x128xf32, #tpu.memory_space<vmem>>, %arg4: memref<2x4x128xf32, #tpu.memory_space<vmem>>, %arg5: memref<2x8xf32, #tpu.memory_space<vmem>>) attributes {dimension_semantics = [#tpu.dimension_semantics<parallel>], iteration_bounds = array<i64: 1>, scalar_prefetch = 0 : i64, scratch_operands = 0 : i64, tpu.core_type = #tpu.core_type<tc>, window_params = [{transform_indices = @transform_0, window_bounds = array<i64: 8, 16>}, {pipeline_mode = #tpu.pipeline_mode<synchronous>, transform_indices = @transform_1, window_bounds = array<i64: 16, 256>}, {pipeline_mode = #tpu.pipeline_mode<synchronous>, transform_indices = @transform_2, window_bounds = array<i64: 2, 128, 128>}, {pipeline_mode = #tpu.pipeline_mode<synchronous>, transform_indices = @transform_3, window_bounds = array<i64: 2, 4, 128>}, {transform_indices = @transform_4, window_bounds = array<i64: 2, 8>}]} {
    %c0 = arith.constant 0 : index
    %c0_0 = arith.constant 0 : index
    %0 = vector.load %arg1[%c0, %c0_0] : memref<8x16xf32, #tpu.memory_space<vmem>>, vector<8x16xf32>
    %c0_1 = arith.constant 0 : index
    %c0_2 = arith.constant 0 : index
    %1 = vector.load %arg2[%c0_1, %c0_2] : memref<16x256xf32, #tpu.memory_space<vmem>>, vector<16x256xf32>
    %cst = arith.constant dense<0.000000e+00> : vector<8x256xf32>
    %2 = tpu.matmul %0, %1, %cst {dimension_numbers = #tpu.dot_dimension_numbers<[1], [0], [0], [1], [0, 0, 1, 1], [], []>} : vector<8x16xf32>, vector<16x256xf32>, vector<8x256xf32> -> vector<8x256xf32>
    %c0_3 = arith.constant 0 : index
    %c0_4 = arith.constant 0 : index
    %c0_5 = arith.constant 0 : index
    %3 = vector.load %arg4[%c0_3, %c0_4, %c0_5] : memref<2x4x128xf32, #tpu.memory_space<vmem>>, vector<1x4x128xf32>
    %4 = vector.shape_cast %3 : vector<1x4x128xf32> to vector<4x128xf32>
    %5 = vector.extract_strided_slice %2 {offsets = [0, 0], sizes = [8, 128], strides = [1, 1]} : vector<8x256xf32> to vector<8x128xf32>
    %6 = vector.extract_strided_slice %4 {offsets = [0, 0], sizes = [1, 128], strides = [1, 1]} : vector<4x128xf32> to vector<1x128xf32>
    %7 = vector.broadcast %6 : vector<1x128xf32> to vector<8x128xf32>
    %8 = arith.addf %5, %7 : vector<8x128xf32>
    %cst_6 = arith.constant 0.000000e+00 : f32
    %9 = vector.broadcast %cst_6 : f32 to vector<8x128xf32>
    %10 = arith.maximumf %8, %9 : vector<8x128xf32>
    %c0_7 = arith.constant 0 : index
    %c0_8 = arith.constant 0 : index
    %c0_9 = arith.constant 0 : index
    %11 = vector.load %arg3[%c0_7, %c0_8, %c0_9] : memref<2x128x128xf32, #tpu.memory_space<vmem>>, vector<1x128x128xf32>
    %12 = vector.shape_cast %11 : vector<1x128x128xf32> to vector<128x128xf32>
    %cst_10 = arith.constant dense<0.000000e+00> : vector<8x128xf32>
    %13 = tpu.matmul %10, %12, %cst_10 {dimension_numbers = #tpu.dot_dimension_numbers<[1], [0], [0], [1], [0, 0, 1, 1], [], []>} : vector<8x128xf32>, vector<128x128xf32>, vector<8x128xf32> -> vector<8x128xf32>
    %14 = vector.extract_strided_slice %4 {offsets = [1, 0], sizes = [1, 128], strides = [1, 1]} : vector<4x128xf32> to vector<1x128xf32>
    %15 = vector.broadcast %14 : vector<1x128xf32> to vector<8x128xf32>
    %16 = arith.addf %13, %15 : vector<8x128xf32>
    %cst_11 = arith.constant 0.000000e+00 : f32
    %17 = vector.broadcast %cst_11 : f32 to vector<8x128xf32>
    %18 = arith.maximumf %16, %17 : vector<8x128xf32>
    %19 = vector.extract_strided_slice %4 {offsets = [2, 0], sizes = [1, 128], strides = [1, 1]} : vector<4x128xf32> to vector<1x128xf32>
    %20 = vector.broadcast %19 : vector<1x128xf32> to vector<8x128xf32>
    %21 = arith.mulf %18, %20 : vector<8x128xf32>
    %cst_12 = arith.constant dense<0.000000e+00> : vector<8xf32>
    %22 = vector.multi_reduction <add>, %21, %cst_12 [1] : vector<8x128xf32> to vector<8xf32>
    %23 = vector.shape_cast %22 : vector<8xf32> to vector<8x1xf32>
    %24 = vector.extract_strided_slice %4 {offsets = [3, 0], sizes = [1, 1], strides = [1, 1]} : vector<4x128xf32> to vector<1x1xf32>
    %25 = vector.broadcast %24 : vector<1x1xf32> to vector<8x1xf32>
    %26 = arith.addf %23, %25 : vector<8x1xf32>
    %27 = vector.shape_cast %26 : vector<8x1xf32> to vector<8xf32>
    %c0_13 = arith.constant 0 : index
    %c0_14 = arith.constant 0 : index
    %28 = vector.load %arg5[%c0_13, %c0_14] : memref<2x8xf32, #tpu.memory_space<vmem>>, vector<1x8xf32>
    %29 = vector.shape_cast %28 : vector<1x8xf32> to vector<8xf32>
    %30 = vector.shape_cast %27 : vector<8xf32> to vector<1x8xf32>
    tpu.vector_store %arg5[%c0_13, %c0_14], %30 {strides = array<i32>} : memref<2x8xf32, #tpu.memory_space<vmem>>, vector<1x8xf32>,
    %c1 = arith.constant 1 : index
    %c0_15 = arith.constant 0 : index
    %c0_16 = arith.constant 0 : index
    %31 = vector.load %arg4[%c1, %c0_15, %c0_16] : memref<2x4x128xf32, #tpu.memory_space<vmem>>, vector<1x4x128xf32>
    %32 = vector.shape_cast %31 : vector<1x4x128xf32> to vector<4x128xf32>
    %33 = vector.extract_strided_slice %2 {offsets = [0, 128], sizes = [8, 128], strides = [1, 1]} : vector<8x256xf32> to vector<8x128xf32>
    %34 = vector.extract_strided_slice %32 {offsets = [0, 0], sizes = [1, 128], strides = [1, 1]} : vector<4x128xf32> to vector<1x128xf32>
    %35 = vector.broadcast %34 : vector<1x128xf32> to vector<8x128xf32>
    %36 = arith.addf %33, %35 : vector<8x128xf32>
    %cst_17 = arith.constant 0.000000e+00 : f32
    %37 = vector.broadcast %cst_17 : f32 to vector<8x128xf32>
    %38 = arith.maximumf %36, %37 : vector<8x128xf32>
    %c1_18 = arith.constant 1 : index
    %c0_19 = arith.constant 0 : index
    %c0_20 = arith.constant 0 : index
    %39 = vector.load %arg3[%c1_18, %c0_19, %c0_20] : memref<2x128x128xf32, #tpu.memory_space<vmem>>, vector<1x128x128xf32>
    %40 = vector.shape_cast %39 : vector<1x128x128xf32> to vector<128x128xf32>
    %cst_21 = arith.constant dense<0.000000e+00> : vector<8x128xf32>
    %41 = tpu.matmul %38, %40, %cst_21 {dimension_numbers = #tpu.dot_dimension_numbers<[1], [0], [0], [1], [0, 0, 1, 1], [], []>} : vector<8x128xf32>, vector<128x128xf32>, vector<8x128xf32> -> vector<8x128xf32>
    %42 = vector.extract_strided_slice %32 {offsets = [1, 0], sizes = [1, 128], strides = [1, 1]} : vector<4x128xf32> to vector<1x128xf32>
    %43 = vector.broadcast %42 : vector<1x128xf32> to vector<8x128xf32>
    %44 = arith.addf %41, %43 : vector<8x128xf32>
    %cst_22 = arith.constant 0.000000e+00 : f32
    %45 = vector.broadcast %cst_22 : f32 to vector<8x128xf32>
    %46 = arith.maximumf %44, %45 : vector<8x128xf32>
    %47 = vector.extract_strided_slice %32 {offsets = [2, 0], sizes = [1, 128], strides = [1, 1]} : vector<4x128xf32> to vector<1x128xf32>
    %48 = vector.broadcast %47 : vector<1x128xf32> to vector<8x128xf32>
    %49 = arith.mulf %46, %48 : vector<8x128xf32>
    %cst_23 = arith.constant dense<0.000000e+00> : vector<8xf32>
    %50 = vector.multi_reduction <add>, %49, %cst_23 [1] : vector<8x128xf32> to vector<8xf32>
    %51 = vector.shape_cast %50 : vector<8xf32> to vector<8x1xf32>
    %52 = vector.extract_strided_slice %32 {offsets = [3, 0], sizes = [1, 1], strides = [1, 1]} : vector<4x128xf32> to vector<1x1xf32>
    %53 = vector.broadcast %52 : vector<1x1xf32> to vector<8x1xf32>
    %54 = arith.addf %51, %53 : vector<8x1xf32>
    %55 = vector.shape_cast %54 : vector<8x1xf32> to vector<8xf32>
    %c1_24 = arith.constant 1 : index
    %c0_25 = arith.constant 0 : index
    %56 = vector.load %arg5[%c1_24, %c0_25] : memref<2x8xf32, #tpu.memory_space<vmem>>, vector<1x8xf32>
    %57 = vector.shape_cast %56 : vector<1x8xf32> to vector<8xf32>
    %58 = vector.shape_cast %55 : vector<8xf32> to vector<1x8xf32>
    tpu.vector_store %arg5[%c1_24, %c0_25], %58 {strides = array<i32>} : memref<2x8xf32, #tpu.memory_space<vmem>>, vector<1x8xf32>,
    return
  }
  func.func @transform_0(%arg0: i32) -> (i32, i32) {
    %c0_i32 = arith.constant 0 : i32
    %c0_i32_0 = arith.constant 0 : i32
    return %arg0, %c0_i32 : i32, i32
  }
  func.func @transform_1(%arg0: i32) -> (i32, i32) {
    %c0_i32 = arith.constant 0 : i32
    %c0_i32_0 = arith.constant 0 : i32
    %c0_i32_1 = arith.constant 0 : i32
    return %c0_i32, %c0_i32_0 : i32, i32
  }
  func.func @transform_2(%arg0: i32) -> (i32, i32, i32) {
    %c0_i32 = arith.constant 0 : i32
    %c0_i32_0 = arith.constant 0 : i32
    %c0_i32_1 = arith.constant 0 : i32
    %c0_i32_2 = arith.constant 0 : i32
    return %c0_i32, %c0_i32_0, %c0_i32_1 : i32, i32, i32
  }
  func.func @transform_3(%arg0: i32) -> (i32, i32, i32) {
    %c0_i32 = arith.constant 0 : i32
    %c0_i32_0 = arith.constant 0 : i32
    %c0_i32_1 = arith.constant 0 : i32
    %c0_i32_2 = arith.constant 0 : i32
    return %c0_i32, %c0_i32_0, %c0_i32_1 : i32, i32, i32
  }
  func.func @transform_4(%arg0: i32) -> (i32, i32) {
    %c0_i32 = arith.constant 0 : i32
    %c0_i32_0 = arith.constant 0 : i32
    return %c0_i32, %arg0 : i32, i32
  }
}

</mosaic_0001>

<llo_original>
// kernel: tpu_custom_call.1
$region0: #{tpu_custom_call.1}
  #allocation0 [shape = 'u32[]', space=smem, size = 0x4, offset = 0x4, fixed_abs, tag = 'smem constant byte address 0x4 - core index']
  #allocation1 [shape = 'u32[144,128]{1,0:T(1,128)}', space=vmem, size = 0x12000, scoped, tag = 'internal scratch']
  %s0 = inlined_call_operand.hbm [shape: f32[8,16], index: 0, kind: input, shape index: {}]
  %s1 = inlined_call_operand.hbm [shape: f32[16,256], index: 1, kind: input, shape index: {}]
  %s2 = inlined_call_operand.hbm [shape: f32[2,128,128], index: 2, kind: input, shape index: {}]
  %s3 = inlined_call_operand.vmem [shape: f32[2,4,128], index: 3, kind: input, shape index: {}]
  %s4 = inlined_call_operand.hbm [shape: f32[2,8], index: 4, kind: output, shape index: {}]
  %s5 = sld [smem:[#allocation0]]
  $region38: #{tpu_custom_call.1} parent=0
    _
  %s7 = ssub.s32 1, %s5
  %s8 = scalar_select 0, %s7, %s5
  $region1: #{tpu_custom_call.1} parent=0
    #allocation2 [shape = 'u8[4096]{0}', space=vmem, size = 0x1000, scoped, tag = 'input window, operand 0, single buffered']
    #allocation3 [shape = 's32[1]{0}', space=sflag, size = 0x4, scoped, tag = 'scoped memory for tpu_custom_call.1']
    #allocation4 [shape = 's32[1]{0}', space=sflag, size = 0x4, scoped, tag = 'scoped memory for tpu_custom_call.1']
    #allocation5 [shape = 'u8[16384]{0}', space=vmem, size = 0x4000, scoped, tag = 'input window, operand 1, single buffered']
    #allocation6 [shape = 's32[1]{0}', space=sflag, size = 0x4, scoped, tag = 'scoped memory for tpu_custom_call.1']
    #allocation7 [shape = 'u8[131072]{0}', space=vmem, size = 0x20000, scoped, tag = 'input window, operand 2, single buffered']
    #allocation8 [shape = 'u8[1024]{0}', space=vmem, size = 0x400, scoped, tag = 'output window, operand 0, single buffered']
    %9 = vsyncpa [#allocation3], 0
    %10 = vsyncpa [#allocation6], 0
    %11 = vsyncpa [#allocation4], 0
    // Predicated region
    $region2: #{tpu_custom_call.1} parent=1 // pred_check
      _
    $region3: #{tpu_custom_call.1} parent=1 // pred_check_branch
      %13 = sbr.rel (0) target = $region5
    $region4: #{tpu_custom_call.1} parent=1 // pred_region
      %s15 = ssub.s32 128, 128
      %16 = vsyncadd [#allocation3], %s15
      %s18 = sshll.u32 [#allocation2], 4
      %s19 = int_to_ptr.vmem [resolvable:$true] %s18
      %21 = dma.hbm_to_vmem [thread:$0]  %s0, 128, %s19, [#allocation3]
    $region5: #{tpu_custom_call.1} parent=1 // pred_fallthru
      _
    // Predicated region
    $region6: #{tpu_custom_call.1} parent=1 // pred_check
      _
    $region7: #{tpu_custom_call.1} parent=1 // pred_check_branch
      %23 = sbr.rel (0) target = $region9
    $region8: #{tpu_custom_call.1} parent=1 // pred_region
      %s25 = ssub.s32 512, 512
      %26 = vsyncadd [#allocation6], %s25
      %s27 = sshll.u32 [#allocation5], 4
      %s28 = int_to_ptr.vmem [resolvable:$true] %s27
      %33 = dma.hbm_to_vmem [thread:$0]  %s1, 512, %s28, [#allocation6], 256, 256, 16
    $region9: #{tpu_custom_call.1} parent=1 // pred_fallthru
      _
    // Predicated region
    $region10: #{tpu_custom_call.1} parent=1 // pred_check
      _
    $region11: #{tpu_custom_call.1} parent=1 // pred_check_branch
      %35 = sbr.rel (0) target = $region13
    $region12: #{tpu_custom_call.1} parent=1 // pred_region
      %s37 = ssub.s32 4096, 4096
      %38 = vsyncadd [#allocation6], %s37
      %s39 = sshll.u32 [#allocation7], 4
      %s40 = int_to_ptr.vmem [resolvable:$true] %s39
      %45 = dma.hbm_to_vmem [thread:$0]  %s2, 4096, %s40, [#allocation6], 128, 128, 8
    $region13: #{tpu_custom_call.1} parent=1 // pred_fallthru
      _
    // Predicated region
    $region14: #{tpu_custom_call.1} parent=1 // pred_check
      _
    $region15: #{tpu_custom_call.1} parent=1 // pred_check_branch
      %47 = sbr.rel (0) target = $region17
    $region16: #{tpu_custom_call.1} parent=1 // pred_region
      _
    $region17: #{tpu_custom_call.1} parent=1 // pred_fallthru
      _
    // Predicated region
    $region18: #{tpu_custom_call.1} parent=1 // pred_check
      _
    $region19: #{tpu_custom_call.1} parent=1 // pred_check_branch
      %49 = sbr.rel (0) target = $region21
    $region20: #{tpu_custom_call.1} parent=1 // pred_region
      %50 = dma.done [#allocation3], 128
    $region21: #{tpu_custom_call.1} parent=1 // pred_fallthru
      _
    // Predicated region
    $region22: #{tpu_custom_call.1} parent=1 // pred_check
      _
    $region23: #{tpu_custom_call.1} parent=1 // pred_check_branch
      %52 = sbr.rel (0) target = $region25
    $region24: #{tpu_custom_call.1} parent=1 // pred_region
      %53 = dma.done [#allocation6], 512
    $region25: #{tpu_custom_call.1} parent=1 // pred_fallthru
      _
    // Predicated region
    $region26: #{tpu_custom_call.1} parent=1 // pred_check
      _
    $region27: #{tpu_custom_call.1} parent=1 // pred_check_branch
      %55 = sbr.rel (0) target = $region29
    $region28: #{tpu_custom_call.1} parent=1 // pred_region
      %56 = dma.done [#allocation6], 4096
    $region29: #{tpu_custom_call.1} parent=1 // pred_fallthru
      _
    %v57 = vld [vmem:[#allocation2] sm:$0xff]
    %v58 = vld [vmem:[#allocation5] sm:$0xff]
    %v59 = vld [vmem:[#allocation5 + $0x8] sm:$0xff]
    %v60 = vld [vmem:[#allocation5 + $0x10] sm:$0xff]
    %v61 = vld [vmem:[#allocation5 + $0x18] sm:$0xff]
    %vm62 = vcmask 130048
    %v64 = vsel %vm62, %v57, 0
    %66 = vmatprep.subr.mxu0 %v59
    %67 = vmatpush1.msra.mxu0 %v58
    %68 = vmatprep.subr.mxu0 %v61
    %69 = vmatpush1.msra.mxu0 %v60
    %70 = vmatprep.subr.mxu0 0.0
    %71 = vmatpush1.msra.mxu0 0.0
    %72 = vmatprep.subr.mxu0 0.0
    %73 = vmatpush1.msra.mxu0 0.0
    %74 = vmatprep.subr.mxu0 0.0
    %75 = vmatpush1.msra.mxu0 0.0
    %76 = vmatprep.subr.mxu0 0.0
    %77 = vmatpush1.msra.mxu0 0.0
    %78 = vmatprep.subr.mxu0 0.0
    %79 = vmatpush1.msra.mxu0 0.0
    %80 = vmatprep.subr.mxu0 0.0
    %81 = vmatpush1.msra.mxu0 0.0
    %82 = vmatprep.subr.mxu0 0.0
    %83 = vmatpush1.msra.mxu0 0.0
    %84 = vmatprep.subr.mxu0 0.0
    %85 = vmatpush1.msra.mxu0 0.0
    %86 = vmatprep.subr.mxu0 0.0
    %87 = vmatpush1.msra.mxu0 0.0
    %88 = vmatprep.subr.mxu0 0.0
    %89 = vmatpush1.msra.mxu0 0.0
    %90 = vmatprep.subr.mxu0 0.0
    %91 = vmatpush1.msra.mxu0 0.0
    %92 = vmatprep.subr.mxu0 0.0
    %93 = vmatpush1.msra.mxu0 0.0
    %94 = vmatprep.subr.mxu0 0.0
    %95 = vmatpush1.msra.mxu0 0.0
    %96 = vmatprep.subr.mxu0 0.0
    %97 = vmatpush1.msra.mxu0 0.0
    %98 = vmatprep.subr.mxu0 0.0
    %99 = vmatpush1.msra.mxu0 0.0
    %100 = vmatprep.subr.mxu0 0.0
    %101 = vmatpush1.msra.mxu0 0.0
    %102 = vmatprep.subr.mxu0 0.0
    %103 = vmatpush1.msra.mxu0 0.0
    %104 = vmatprep.subr.mxu0 0.0
    %105 = vmatpush1.msra.mxu0 0.0
    %106 = vmatprep.subr.mxu0 0.0
    %107 = vmatpush1.msra.mxu0 0.0
    %108 = vmatprep.subr.mxu0 0.0
    %109 = vmatpush1.msra.mxu0 0.0
    %110 = vmatprep.subr.mxu0 0.0
    %111 = vmatpush1.msra.mxu0 0.0
    %112 = vmatprep.subr.mxu0 0.0
    %113 = vmatpush1.msra.mxu0 0.0
    %114 = vmatprep.subr.mxu0 0.0
    %115 = vmatpush1.msra.mxu0 0.0
    %116 = vmatprep.subr.mxu0 0.0
    %117 = vmatpush1.msra.mxu0 0.0
    %118 = vmatprep.subr.mxu0 0.0
    %119 = vmatpush1.msra.mxu0 0.0
    %120 = vmatprep.subr.mxu0 0.0
    %121 = vmatpush1.msra.mxu0 0.0
    %122 = vmatprep.subr.mxu0 0.0
    %123 = vmatpush1.msra.mxu0 0.0
    %124 = vmatprep.subr.mxu0 0.0
    %125 = vmatpush1.msra.mxu0 0.0
    %126 = vmatprep.subr.mxu0 0.0
    %127 = vmatpush1.msra.mxu0 0.0
    %128 = vmatprep.subr.mxu0 0.0
    %129 = vmatpush1.msra.mxu0 0.0
    %130 = vmatprep.mubr.f32.mxu0 0.0
    %131 = vmatmul.mubr.f32.gmra.mrb[0].mxu0 %v64
    %v132 = vpop.f32.mrb[0].mxu0
    %v133 = vadd.f32 0.0, %v132
    %v134 = vpop.f32.mrb[0].mxu0
    %v135 = vadd.f32 0.0, %v134
    %136 = vdwg.mxu0
    %v137 = vld [vmem:[%s3] sm:$0xf]
    %v138 = vlaneseq
    %v139 = vshrl.u32 %v138, 7
    %v140 = vsub.s32 0, %v139
    %v141 = vrot.slane %v137, %v140
    %v142 = vadd.f32 %v133, %v141
    %v143 = vmax.f32 %v142, 0.0
    %v144 = vld [vmem:[#allocation7] sm:$0xff]
    %v145 = vld [vmem:[#allocation7 + $0x8] sm:$0xff]
    %v146 = vld [vmem:[#allocation7 + $0x10] sm:$0xff]
    %v147 = vld [vmem:[#allocation7 + $0x18] sm:$0xff]
    %v148 = vld [vmem:[#allocation7 + $0x20] sm:$0xff]
    %v149 = vld [vmem:[#allocation7 + $0x28] sm:$0xff]
    %v150 = vld [vmem:[#allocation7 + $0x30] sm:$0xff]
    %v151 = vld [vmem:[#allocation7 + $0x38] sm:$0xff]
    %v152 = vld [vmem:[#allocation7 + $0x40] sm:$0xff]
    %v153 = vld [vmem:[#allocation7 + $0x48] sm:$0xff]
    %v154 = vld [vmem:[#allocation7 + $0x50] sm:$0xff]
    %v155 = vld [vmem:[#allocation7 + $0x58] sm:$0xff]
    %v156 = vld [vmem:[#allocation7 + $0x60] sm:$0xff]
    %v157 = vld [vmem:[#allocation7 + $0x68] sm:$0xff]
    %v158 = vld [vmem:[#allocation7 + $0x70] sm:$0xff]
    %v159 = vld [vmem:[#allocation7 + $0x78] sm:$0xff]
    %v160 = vlaneseq
    %v161 = vshrl.u32 %v160, 7
    %v162 = vsub.s32 1, %v161
    %v163 = vrot.slane %v137, %v162
    %164 = vmatprep.subr.mxu0 0.0
    %165 = vmatpush1.msra.mxu0 %v144
    %166 = vmatprep.subr.mxu0 0.0
    %167 = vmatpush1.msra.mxu0 %v145
    %168 = vmatprep.subr.mxu0 0.0
    %169 = vmatpush1.msra.mxu0 %v146
    %170 = vmatprep.subr.mxu0 0.0
    %171 = vmatpush1.msra.mxu0 %v147
    %172 = vmatprep.subr.mxu0 0.0
    %173 = vmatpush1.msra.mxu0 %v148
    %174 = vmatprep.subr.mxu0 0.0
    %175 = vmatpush1.msra.mxu0 %v149
    %176 = vmatprep.subr.mxu0 0.0
    %177 = vmatpush1.msra.mxu0 %v150
    %178 = vmatprep.subr.mxu0 0.0
    %179 = vmatpush1.msra.mxu0 %v151
    %180 = vmatprep.subr.mxu0 0.0
    %181 = vmatpush1.msra.mxu0 %v152
    %182 = vmatprep.subr.mxu0 0.0
    %183 = vmatpush1.msra.mxu0 %v153
    %184 = vmatprep.subr.mxu0 0.0
    %185 = vmatpush1.msra.mxu0 %v154
    %186 = vmatprep.subr.mxu0 0.0
    %187 = vmatpush1.msra.mxu0 %v155
    %188 = vmatprep.subr.mxu0 0.0
    %189 = vmatpush1.msra.mxu0 %v156
    %190 = vmatprep.subr.mxu0 0.0
    %191 = vmatpush1.msra.mxu0 %v157
    %192 = vmatprep.subr.mxu0 0.0
    %193 = vmatpush1.msra.mxu0 %v158
    %194 = vmatprep.subr.mxu0 0.0
    %195 = vmatpush1.msra.mxu0 %v159
    %196 = vmatprep.subr.mxu0 0.0
    %197 = vmatpush1.msra.mxu0 0.0
    %198 = vmatprep.subr.mxu0 0.0
    %199 = vmatpush1.msra.mxu0 0.0
    %200 = vmatprep.subr.mxu0 0.0
    %201 = vmatpush1.msra.mxu0 0.0
    %202 = vmatprep.subr.mxu0 0.0
    %203 = vmatpush1.msra.mxu0 0.0
    %204 = vmatprep.subr.mxu0 0.0
    %205 = vmatpush1.msra.mxu0 0.0
    %206 = vmatprep.subr.mxu0 0.0
    %207 = vmatpush1.msra.mxu0 0.0
    %208 = vmatprep.subr.mxu0 0.0
    %209 = vmatpush1.msra.mxu0 0.0
    %210 = vmatprep.subr.mxu0 0.0
    %211 = vmatpush1.msra.mxu0 0.0
    %212 = vmatprep.subr.mxu0 0.0
    %213 = vmatpush1.msra.mxu0 0.0
    %214 = vmatprep.subr.mxu0 0.0
    %215 = vmatpush1.msra.mxu0 0.0
    %216 = vmatprep.subr.mxu0 0.0
    %217 = vmatpush1.msra.mxu0 0.0
    %218 = vmatprep.subr.mxu0 0.0
    %219 = vmatpush1.msra.mxu0 0.0
    %220 = vmatprep.subr.mxu0 0.0
    %221 = vmatpush1.msra.mxu0 0.0
    %222 = vmatprep.subr.mxu0 0.0
    %223 = vmatpush1.msra.mxu0 0.0
    %224 = vmatprep.subr.mxu0 0.0
    %225 = vmatpush1.msra.mxu0 0.0
    %226 = vmatprep.subr.mxu0 0.0
    %227 = vmatpush1.msra.mxu0 0.0
    %228 = vmatprep.mubr.f32.mxu0 0.0
    %229 = vmatmul.mubr.f32.gmra.mrb[0].mxu0 %v143
    %v230 = vpop.f32.mrb[0].mxu0
    %v231 = vadd.f32 %v163, %v230
    %v232 = vpop.f32.mrb[0].mxu0
    %233 = vdwg.mxu0
    %v234 = vmax.f32 %v231, 0.0
    %v235 = vlaneseq
    %v236 = vshrl.u32 %v235, 7
    %v237 = vsub.s32 2, %v236
    %v238 = vrot.slane %v137, %v237
    %v239 = vmul.f32 %v234, %v238
    %240 = vadd.xlane.f32.xlu0 %v239
    %v241 = vpop.xlane.xlu0 %240
    %v242 = vlaneseq
    %v243 = vshrl.u32 %v242, 7
    %v244 = vsub.s32 3, %v243
    %v245 = vrot.slane %v137, %v244
    %v246 = vadd.f32 %v241, %v245
    %248 = vset.pattern.permute.xlu0 0
    %249 = vperm.xlu0 %248, %v246
    %v250 = vpop.permute.xlu0 %249
    %v251 = vlaneseq
    %v252 = vand.u32 %v251, 127
    %v253 = vlaneseq
    %v254 = vshrl.u32 %v253, 7
    %v255 = vsub.s32 %v252, %v254
    %v256 = vrot.slane %v250, %v255
    %vm258 = vcmask 57344
    %259 = vst.msk [vmem:[#allocation8] sm:$0x1] %vm258, %v256
    %s260 = scalar_lea.vmem %s3, 4
    %v261 = vld [vmem:[%s260] sm:$0xf]
    %v262 = vlaneseq
    %v263 = vshrl.u32 %v262, 7
    %v264 = vsub.s32 0, %v263
    %v265 = vrot.slane %v261, %v264
    %v266 = vadd.f32 %v135, %v265
    %v267 = vmax.f32 %v266, 0.0
    %s268 = scalar_lea.vmem [#allocation7], 128
    %v269 = vld [vmem:[%s268] sm:$0xff]
    %v270 = vld [vmem:[%s268 + $0x8] sm:$0xff]
    %v271 = vld [vmem:[%s268 + $0x10] sm:$0xff]
    %v272 = vld [vmem:[%s268 + $0x18] sm:$0xff]
    %v273 = vld [vmem:[%s268 + $0x20] sm:$0xff]
    %v274 = vld [vmem:[%s268 + $0x28] sm:$0xff]
    %v275 = vld [vmem:[%s268 + $0x30] sm:$0xff]
    %v276 = vld [vmem:[%s268 + $0x38] sm:$0xff]
    %v277 = vld [vmem:[%s268 + $0x40] sm:$0xff]
    %v278 = vld [vmem:[%s268 + $0x48] sm:$0xff]
    %v279 = vld [vmem:[%s268 + $0x50] sm:$0xff]
    %v280 = vld [vmem:[%s268 + $0x58] sm:$0xff]
    %v281 = vld [vmem:[%s268 + $0x60] sm:$0xff]
    %v282 = vld [vmem:[%s268 + $0x68] sm:$0xff]
    %v283 = vld [vmem:[%s268 + $0x70] sm:$0xff]
    %v284 = vld [vmem:[%s268 + $0x78] sm:$0xff]
    %v285 = vlaneseq
    %v286 = vshrl.u32 %v285, 7
    %v287 = vsub.s32 1, %v286
    %v288 = vrot.slane %v261, %v287
    %289 = vmatprep.subr.mxu0 0.0
    %290 = vmatpush1.msra.mxu0 %v269
    %291 = vmatprep.subr.mxu0 0.0
    %292 = vmatpush1.msra.mxu0 %v270
    %293 = vmatprep.subr.mxu0 0.0
    %294 = vmatpush1.msra.mxu0 %v271
    %295 = vmatprep.subr.mxu0 0.0
    %296 = vmatpush1.msra.mxu0 %v272
    %297 = vmatprep.subr.mxu0 0.0
    %298 = vmatpush1.msra.mxu0 %v273
    %299 = vmatprep.subr.mxu0 0.0
    %300 = vmatpush1.msra.mxu0 %v274
    %301 = vmatprep.subr.mxu0 0.0
    %302 = vmatpush1.msra.mxu0 %v275
    %303 = vmatprep.subr.mxu0 0.0
    %304 = vmatpush1.msra.mxu0 %v276
    %305 = vmatprep.subr.mxu0 0.0
    %306 = vmatpush1.msra.mxu0 %v277
    %307 = vmatprep.subr.mxu0 0.0
    %308 = vmatpush1.msra.mxu0 %v278
    %309 = vmatprep.subr.mxu0 0.0
    %310 = vmatpush1.msra.mxu0 %v279
    %311 = vmatprep.subr.mxu0 0.0
    %312 = vmatpush1.msra.mxu0 %v280
    %313 = vmatprep.subr.mxu0 0.0
    %314 = vmatpush1.msra.mxu0 %v281
    %315 = vmatprep.subr.mxu0 0.0
    %316 = vmatpush1.msra.mxu0 %v282
    %317 = vmatprep.subr.mxu0 0.0
    %318 = vmatpush1.msra.mxu0 %v283
    %319 = vmatprep.subr.mxu0 0.0
    %320 = vmatpush1.msra.mxu0 %v284
    %321 = vmatprep.subr.mxu0 0.0
    %322 = vmatpush1.msra.mxu0 0.0
    %323 = vmatprep.subr.mxu0 0.0
    %324 = vmatpush1.msra.mxu0 0.0
    %325 = vmatprep.subr.mxu0 0.0
    %326 = vmatpush1.msra.mxu0 0.0
    %327 = vmatprep.subr.mxu0 0.0
    %328 = vmatpush1.msra.mxu0 0.0
    %329 = vmatprep.subr.mxu0 0.0
    %330 = vmatpush1.msra.mxu0 0.0
    %331 = vmatprep.subr.mxu0 0.0
    %332 = vmatpush1.msra.mxu0 0.0
    %333 = vmatprep.subr.mxu0 0.0
    %334 = vmatpush1.msra.mxu0 0.0
    %335 = vmatprep.subr.mxu0 0.0
    %336 = vmatpush1.msra.mxu0 0.0
    %337 = vmatprep.subr.mxu0 0.0
    %338 = vmatpush1.msra.mxu0 0.0
    %339 = vmatprep.subr.mxu0 0.0
    %340 = vmatpush1.msra.mxu0 0.0
    %341 = vmatprep.subr.mxu0 0.0
    %342 = vmatpush1.msra.mxu0 0.0
    %343 = vmatprep.subr.mxu0 0.0
    %344 = vmatpush1.msra.mxu0 0.0
    %345 = vmatprep.subr.mxu0 0.0
    %346 = vmatpush1.msra.mxu0 0.0
    %347 = vmatprep.subr.mxu0 0.0
    %348 = vmatpush1.msra.mxu0 0.0
    %349 = vmatprep.subr.mxu0 0.0
    %350 = vmatpush1.msra.mxu0 0.0
    %351 = vmatprep.subr.mxu0 0.0
    %352 = vmatpush1.msra.mxu0 0.0
    %353 = vmatprep.mubr.f32.mxu0 0.0
    %354 = vmatmul.mubr.f32.gmra.mrb[0].mxu0 %v267
    %v355 = vpop.f32.mrb[0].mxu0
    %v356 = vadd.f32 %v288, %v355
    %v357 = vpop.f32.mrb[0].mxu0
    %358 = vdwg.mxu0
    %v359 = vmax.f32 %v356, 0.0
    %v360 = vlaneseq
    %v361 = vshrl.u32 %v360, 7
    %v362 = vsub.s32 2, %v361
    %v363 = vrot.slane %v261, %v362
    %v364 = vmul.f32 %v359, %v363
    %365 = vadd.xlane.f32.xlu0 %v364
    %v366 = vpop.xlane.xlu0 %365
    %v367 = vlaneseq
    %v368 = vshrl.u32 %v367, 7
    %v369 = vsub.s32 3, %v368
    %v370 = vrot.slane %v261, %v369
    %v371 = vadd.f32 %v366, %v370
    %373 = vset.pattern.permute.xlu0 0
    %374 = vperm.xlu0 %373, %v371
    %v375 = vpop.permute.xlu0 %374
    %v376 = vlaneseq
    %v377 = vshrl.u32 %v376, 7
    %v378 = vsub.s32 %v252, %v377
    %v379 = vrot.slane %v375, %v378
    %381 = vst.msk [vmem:[#allocation8 + $0x1] sm:$0x1] %vm258, %v379
    // Predicated region
    $region30: #{tpu_custom_call.1} parent=1 // pred_check
      _
    $region31: #{tpu_custom_call.1} parent=1 // pred_check_branch
      %383 = sbr.rel (0) target = $region33
    $region32: #{tpu_custom_call.1} parent=1 // pred_region
      %s385 = ssub.s32 32, 32
      %386 = vsyncadd [#allocation4], %s385
      %s388 = sshll.u32 [#allocation8], 4
      %s389 = int_to_ptr.vmem [resolvable:$true] %s388
      %391 = dma.vmem_to_hbm [thread:$0]  %s389, 32, %s4, [#allocation4]
    $region33: #{tpu_custom_call.1} parent=1 // pred_fallthru
      _
    // Predicated region
    $region34: #{tpu_custom_call.1} parent=1 // pred_check
      _
    $region35: #{tpu_custom_call.1} parent=1 // pred_check_branch
      %393 = sbr.rel (0) target = $region37
    $region36: #{tpu_custom_call.1} parent=1 // pred_region
      %394 = dma.done [#allocation4], 32
    $region37: #{tpu_custom_call.1} parent=1 // pred_fallthru
      _
    %395 = vsyncpa [#allocation3], 1
    %396 = vsyncpa [#allocation6], 1
    %397 = vsyncpa [#allocation4], 1

// kernel: tpu_custom_call.1
$region0: #{tpu_custom_call.1}
  #allocation0 [shape = 'u32[]', space=smem, size = 0x4, offset = 0x4, fixed_abs, tag = 'smem constant byte address 0x4 - core index']
  #allocation1 [shape = 'u32[144,128]{1,0:T(1,128)}', space=vmem, size = 0x12000, scoped, tag = 'internal scratch']
  %s0 = inlined_call_operand.hbm [shape: f32[8,16], index: 0, kind: input, shape index: {}]
  %s1 = inlined_call_operand.hbm [shape: f32[16,256], index: 1, kind: input, shape index: {}]
  %s2 = inlined_call_operand.hbm [shape: f32[2,128,128], index: 2, kind: input, shape index: {}]
  %s3 = inlined_call_operand.vmem [shape: f32[2,4,128], index: 3, kind: input, shape index: {}]
  %s4 = inlined_call_operand.hbm [shape: f32[2,8], index: 4, kind: output, shape index: {}]
  %s5 = sld [smem:[#allocation0]]
  $region38: #{tpu_custom_call.1} parent=0
    _
  %s7 = ssub.s32 1, %s5
  %s8 = scalar_select 0, %s7, %s5
  $region1: #{tpu_custom_call.1} parent=0
    #allocation2 [shape = 'u8[4096]{0}', space=vmem, size = 0x1000, scoped, tag = 'input window, operand 0, single buffered']
    #allocation3 [shape = 's32[1]{0}', space=sflag, size = 0x4, scoped, tag = 'scoped memory for tpu_custom_call.1']
    #allocation4 [shape = 's32[1]{0}', space=sflag, size = 0x4, scoped, tag = 'scoped memory for tpu_custom_call.1']
    #allocation5 [shape = 'u8[16384]{0}', space=vmem, size = 0x4000, scoped, tag = 'input window, operand 1, single buffered']
    #allocation6 [shape = 's32[1]{0}', space=sflag, size = 0x4, scoped, tag = 'scoped memory for tpu_custom_call.1']
    #allocation7 [shape = 'u8[131072]{0}', space=vmem, size = 0x20000, scoped, tag = 'input window, operand 2, single buffered']
    #allocation8 [shape = 'u8[1024]{0}', space=vmem, size = 0x400, scoped, tag = 'output window, operand 0, single buffered']
    %9 = vsyncpa [#allocation3], 0
    %10 = vsyncpa [#allocation6], 0
    %11 = vsyncpa [#allocation4], 0
    // Predicated region
    $region2: #{tpu_custom_call.1} parent=1 // pred_check
      _
    $region3: #{tpu_custom_call.1} parent=1 // pred_check_branch
      %13 = sbr.rel (0) target = $region5
    $region4: #{tpu_custom_call.1} parent=1 // pred_region
      %s15 = ssub.s32 128, 128
      %16 = vsyncadd [#allocation3], %s15
      %s18 = sshll.u32 [#allocation2], 4
      %s19 = int_to_ptr.vmem [resolvable:$true] %s18
      %21 = dma.hbm_to_vmem [thread:$0]  %s0, 128, %s19, [#allocation3]
    $region5: #{tpu_custom_call.1} parent=1 // pred_fallthru
      _
    // Predicated region
    $region6: #{tpu_custom_call.1} parent=1 // pred_check
      _
    $region7: #{tpu_custom_call.1} parent=1 // pred_check_branch
      %23 = sbr.rel (0) target = $region9
    $region8: #{tpu_custom_call.1} parent=1 // pred_region
      %s25 = ssub.s32 512, 512
      %26 = vsyncadd [#allocation6], %s25
      %s27 = sshll.u32 [#allocation5], 4
      %s28 = int_to_ptr.vmem [resolvable:$true] %s27
      %33 = dma.hbm_to_vmem [thread:$0]  %s1, 512, %s28, [#allocation6], 256, 256, 16
    $region9: #{tpu_custom_call.1} parent=1 // pred_fallthru
      _
    // Predicated region
    $region10: #{tpu_custom_call.1} parent=1 // pred_check
      _
    $region11: #{tpu_custom_call.1} parent=1 // pred_check_branch
      %35 = sbr.rel (0) target = $region13
    $region12: #{tpu_custom_call.1} parent=1 // pred_region
      %s37 = ssub.s32 4096, 4096
      %38 = vsyncadd [#allocation6], %s37
      %s39 = sshll.u32 [#allocation7], 4
      %s40 = int_to_ptr.vmem [resolvable:$true] %s39
      %45 = dma.hbm_to_vmem [thread:$0]  %s2, 4096, %s40, [#allocation6], 128, 128, 8
    $region13: #{tpu_custom_call.1} parent=1 // pred_fallthru
      _
    // Predicated region
    $region14: #{tpu_custom_call.1} parent=1 // pred_check
      _
    $region15: #{tpu_custom_call.1} parent=1 // pred_check_branch
      %47 = sbr.rel (0) target = $region17
    $region16: #{tpu_custom_call.1} parent=1 // pred_region
      _
    $region17: #{tpu_custom_call.1} parent=1 // pred_fallthru
      _
    // Predicated region
    $region18: #{tpu_custom_call.1} parent=1 // pred_check
      _
    $region19: #{tpu_custom_call.1} parent=1 // pred_check_branch
      %49 = sbr.rel (0) target = $region21
    $region20: #{tpu_custom_call.1} parent=1 // pred_region
      %50 = dma.done [#allocation3], 128
    $region21: #{tpu_custom_call.1} parent=1 // pred_fallthru
      _
    // Predicated region
    $region22: #{tpu_custom_call.1} parent=1 // pred_check
      _
    $region23: #{tpu_custom_call.1} parent=1 // pred_check_branch
      %52 = sbr.rel (0) target = $region25
    $region24: #{tpu_custom_call.1} parent=1 // pred_region
      %53 = dma.done [#allocation6], 512
    $region25: #{tpu_custom_call.1} parent=1 // pred_fallthru
      _
    // Predicated region
    $region26: #{tpu_custom_call.1} parent=1 // pred_check
      _
    $region27: #{tpu_custom_call.1} parent=1 // pred_check_branch
      %55 = sbr.rel (0) target = $region29
    $region28: #{tpu_custom_call.1} parent=1 // pred_region
      %56 = dma.done [#allocation6], 4096
    $region29: #{tpu_custom_call.1} parent=1 // pred_fallthru
      _
    %v57 = vld [vmem:[#allocation2] sm:$0xff]
    %v58 = vld [vmem:[#allocation5] sm:$0xff]
    %v59 = vld [vmem:[#allocation5 + $0x8] sm:$0xff]
    %v60 = vld [vmem:[#allocation5 + $0x10] sm:$0xff]
    %v61 = vld [vmem:[#allocation5 + $0x18] sm:$0xff]
    %vm62 = vcmask 130048
    %v64 = vsel %vm62, %v57, 0
    %66 = vmatprep.subr.mxu0 %v59
    %67 = vmatpush1.msra.mxu0 %v58
    %68 = vmatprep.subr.mxu0 %v61
    %69 = vmatpush1.msra.mxu0 %v60
    %70 = vmatprep.subr.mxu0 0.0
    %71 = vmatpush1.msra.mxu0 0.0
    %72 = vmatprep.subr.mxu0 0.0
    %73 = vmatpush1.msra.mxu0 0.0
    %74 = vmatprep.subr.mxu0 0.0
    %75 = vmatpush1.msra.mxu0 0.0
    %76 = vmatprep.subr.mxu0 0.0
    %77 = vmatpush1.msra.mxu0 0.0
    %78 = vmatprep.subr.mxu0 0.0
    %79 = vmatpush1.msra.mxu0 0.0
    %80 = vmatprep.subr.mxu0 0.0
    %81 = vmatpush1.msra.mxu0 0.0
    %82 = vmatprep.subr.mxu0 0.0
    %83 = vmatpush1.msra.mxu0 0.0
    %84 = vmatprep.subr.mxu0 0.0
    %85 = vmatpush1.msra.mxu0 0.0
    %86 = vmatprep.subr.mxu0 0.0
    %87 = vmatpush1.msra.mxu0 0.0
    %88 = vmatprep.subr.mxu0 0.0
    %89 = vmatpush1.msra.mxu0 0.0
    %90 = vmatprep.subr.mxu0 0.0
    %91 = vmatpush1.msra.mxu0 0.0
    %92 = vmatprep.subr.mxu0 0.0
    %93 = vmatpush1.msra.mxu0 0.0
    %94 = vmatprep.subr.mxu0 0.0
    %95 = vmatpush1.msra.mxu0 0.0
    %96 = vmatprep.subr.mxu0 0.0
    %97 = vmatpush1.msra.mxu0 0.0
    %98 = vmatprep.subr.mxu0 0.0
    %99 = vmatpush1.msra.mxu0 0.0
    %100 = vmatprep.subr.mxu0 0.0
    %101 = vmatpush1.msra.mxu0 0.0
    %102 = vmatprep.subr.mxu0 0.0
    %103 = vmatpush1.msra.mxu0 0.0
    %104 = vmatprep.subr.mxu0 0.0
    %105 = vmatpush1.msra.mxu0 0.0
    %106 = vmatprep.subr.mxu0 0.0
    %107 = vmatpush1.msra.mxu0 0.0
    %108 = vmatprep.subr.mxu0 0.0
    %109 = vmatpush1.msra.mxu0 0.0
    %110 = vmatprep.subr.mxu0 0.0
    %111 = vmatpush1.msra.mxu0 0.0
    %112 = vmatprep.subr.mxu0 0.0
    %113 = vmatpush1.msra.mxu0 0.0
    %114 = vmatprep.subr.mxu0 0.0
    %115 = vmatpush1.msra.mxu0 0.0
    %116 = vmatprep.subr.mxu0 0.0
    %117 = vmatpush1.msra.mxu0 0.0
    %118 = vmatprep.subr.mxu0 0.0
    %119 = vmatpush1.msra.mxu0 0.0
    %120 = vmatprep.subr.mxu0 0.0
    %121 = vmatpush1.msra.mxu0 0.0
    %122 = vmatprep.subr.mxu0 0.0
    %123 = vmatpush1.msra.mxu0 0.0
    %124 = vmatprep.subr.mxu0 0.0
    %125 = vmatpush1.msra.mxu0 0.0
    %126 = vmatprep.subr.mxu0 0.0
    %127 = vmatpush1.msra.mxu0 0.0
    %128 = vmatprep.subr.mxu0 0.0
    %129 = vmatpush1.msra.mxu0 0.0
    %130 = vmatprep.mubr.f32.mxu0 0.0
    %131 = vmatmul.mubr.f32.gmra.mrb[0].mxu0 %v64
    %v132 = vpop.f32.mrb[0].mxu0
    %v133 = vadd.f32 0.0, %v132
    %v134 = vpop.f32.mrb[0].mxu0
    %v135 = vadd.f32 0.0, %v134
    %136 = vdwg.mxu0
    %v137 = vld [vmem:[%s3] sm:$0xf]
    %v138 = vlaneseq
    %v139 = vshrl.u32 %v138, 7
    %v140 = vsub.s32 0, %v139
    %v141 = vrot.slane %v137, %v140
    %v142 = vadd.f32 %v133, %v141
    %v143 = vmax.f32 %v142, 0.0
    %v144 = vld [vmem:[#allocation7] sm:$0xff]
    %v145 = vld [vmem:[#allocation7 + $0x8] sm:$0xff]
    %v146 = vld [vmem:[#allocation7 + $0x10] sm:$0xff]
    %v147 = vld [vmem:[#allocation7 + $0x18] sm:$0xff]
    %v148 = vld [vmem:[#allocation7 + $0x20] sm:$0xff]
    %v149 = vld [vmem:[#allocation7 + $0x28] sm:$0xff]
    %v150 = vld [vmem:[#allocation7 + $0x30] sm:$0xff]
    %v151 = vld [vmem:[#allocation7 + $0x38] sm:$0xff]
    %v152 = vld [vmem:[#allocation7 + $0x40] sm:$0xff]
    %v153 = vld [vmem:[#allocation7 + $0x48] sm:$0xff]
    %v154 = vld [vmem:[#allocation7 + $0x50] sm:$0xff]
    %v155 = vld [vmem:[#allocation7 + $0x58] sm:$0xff]
    %v156 = vld [vmem:[#allocation7 + $0x60] sm:$0xff]
    %v157 = vld [vmem:[#allocation7 + $0x68] sm:$0xff]
    %v158 = vld [vmem:[#allocation7 + $0x70] sm:$0xff]
    %v159 = vld [vmem:[#allocation7 + $0x78] sm:$0xff]
    %v160 = vlaneseq
    %v161 = vshrl.u32 %v160, 7
    %v162 = vsub.s32 1, %v161
    %v163 = vrot.slane %v137, %v162
    %164 = vmatprep.subr.mxu0 0.0
    %165 = vmatpush1.msra.mxu0 %v144
    %166 = vmatprep.subr.mxu0 0.0
    %167 = vmatpush1.msra.mxu0 %v145
    %168 = vmatprep.subr.mxu0 0.0
    %169 = vmatpush1.msra.mxu0 %v146
    %170 = vmatprep.subr.mxu0 0.0
    %171 = vmatpush1.msra.mxu0 %v147
    %172 = vmatprep.subr.mxu0 0.0
    %173 = vmatpush1.msra.mxu0 %v148
    %174 = vmatprep.subr.mxu0 0.0
    %175 = vmatpush1.msra.mxu0 %v149
    %176 = vmatprep.subr.mxu0 0.0
    %177 = vmatpush1.msra.mxu0 %v150
    %178 = vmatprep.subr.mxu0 0.0
    %179 = vmatpush1.msra.mxu0 %v151
    %180 = vmatprep.subr.mxu0 0.0
    %181 = vmatpush1.msra.mxu0 %v152
    %182 = vmatprep.subr.mxu0 0.0
    %183 = vmatpush1.msra.mxu0 %v153
    %184 = vmatprep.subr.mxu0 0.0
    %185 = vmatpush1.msra.mxu0 %v154
    %186 = vmatprep.subr.mxu0 0.0
    %187 = vmatpush1.msra.mxu0 %v155
    %188 = vmatprep.subr.mxu0 0.0
    %189 = vmatpush1.msra.mxu0 %v156
    %190 = vmatprep.subr.mxu0 0.0
    %191 = vmatpush1.msra.mxu0 %v157
    %192 = vmatprep.subr.mxu0 0.0
    %193 = vmatpush1.msra.mxu0 %v158
    %194 = vmatprep.subr.mxu0 0.0
    %195 = vmatpush1.msra.mxu0 %v159
    %196 = vmatprep.subr.mxu0 0.0
    %197 = vmatpush1.msra.mxu0 0.0
    %198 = vmatprep.subr.mxu0 0.0
    %199 = vmatpush1.msra.mxu0 0.0
    %200 = vmatprep.subr.mxu0 0.0
    %201 = vmatpush1.msra.mxu0 0.0
    %202 = vmatprep.subr.mxu0 0.0
    %203 = vmatpush1.msra.mxu0 0.0
    %204 = vmatprep.subr.mxu0 0.0
    %205 = vmatpush1.msra.mxu0 0.0
    %206 = vmatprep.subr.mxu0 0.0
    %207 = vmatpush1.msra.mxu0 0.0
    %208 = vmatprep.subr.mxu0 0.0
    %209 = vmatpush1.msra.mxu0 0.0
    %210 = vmatprep.subr.mxu0 0.0
    %211 = vmatpush1.msra.mxu0 0.0
    %212 = vmatprep.subr.mxu0 0.0
    %213 = vmatpush1.msra.mxu0 0.0
    %214 = vmatprep.subr.mxu0 0.0
    %215 = vmatpush1.msra.mxu0 0.0
    %216 = vmatprep.subr.mxu0 0.0
    %217 = vmatpush1.msra.mxu0 0.0
    %218 = vmatprep.subr.mxu0 0.0
    %219 = vmatpush1.msra.mxu0 0.0
    %220 = vmatprep.subr.mxu0 0.0
    %221 = vmatpush1.msra.mxu0 0.0
    %222 = vmatprep.subr.mxu0 0.0
    %223 = vmatpush1.msra.mxu0 0.0
    %224 = vmatprep.subr.mxu0 0.0
    %225 = vmatpush1.msra.mxu0 0.0
    %226 = vmatprep.subr.mxu0 0.0
    %227 = vmatpush1.msra.mxu0 0.0
    %228 = vmatprep.mubr.f32.mxu0 0.0
    %229 = vmatmul.mubr.f32.gmra.mrb[0].mxu0 %v143
    %v230 = vpop.f32.mrb[0].mxu0
    %v231 = vadd.f32 %v163, %v230
    %v232 = vpop.f32.mrb[0].mxu0
    %233 = vdwg.mxu0
    %v234 = vmax.f32 %v231, 0.0
    %v235 = vlaneseq
    %v236 = vshrl.u32 %v235, 7
    %v237 = vsub.s32 2, %v236
    %v238 = vrot.slane %v137, %v237
    %v239 = vmul.f32 %v234, %v238
    %240 = vadd.xlane.f32.xlu0 %v239
    %v241 = vpop.xlane.xlu0 %240
    %v242 = vlaneseq
    %v243 = vshrl.u32 %v242, 7
    %v244 = vsub.s32 3, %v243
    %v245 = vrot.slane %v137, %v244
    %v246 = vadd.f32 %v241, %v245
    %248 = vset.pattern.permute.xlu0 0
    %249 = vperm.xlu0 %248, %v246
    %v250 = vpop.permute.xlu0 %249
    %v251 = vlaneseq
    %v252 = vand.u32 %v251, 127
    %v253 = vlaneseq
    %v254 = vshrl.u32 %v253, 7
    %v255 = vsub.s32 %v252, %v254
    %v256 = vrot.slane %v250, %v255
    %vm258 = vcmask 57344
    %259 = vst.msk [vmem:[#allocation8] sm:$0x1] %vm258, %v256
    %s260 = scalar_lea.vmem %s3, 4
    %v261 = vld [vmem:[%s260] sm:$0xf]
    %v262 = vlaneseq
    %v263 = vshrl.u32 %v262, 7
    %v264 = vsub.s32 0, %v263
    %v265 = vrot.slane %v261, %v264
    %v266 = vadd.f32 %v135, %v265
    %v267 = vmax.f32 %v266, 0.0
    %s268 = scalar_lea.vmem [#allocation7], 128
    %v269 = vld [vmem:[%s268] sm:$0xff]
    %v270 = vld [vmem:[%s268 + $0x8] sm:$0xff]
    %v271 = vld [vmem:[%s268 + $0x10] sm:$0xff]
    %v272 = vld [vmem:[%s268 + $0x18] sm:$0xff]
    %v273 = vld [vmem:[%s268 + $0x20] sm:$0xff]
    %v274 = vld [vmem:[%s268 + $0x28] sm:$0xff]
    %v275 = vld [vmem:[%s268 + $0x30] sm:$0xff]
    %v276 = vld [vmem:[%s268 + $0x38] sm:$0xff]
    %v277 = vld [vmem:[%s268 + $0x40] sm:$0xff]
    %v278 = vld [vmem:[%s268 + $0x48] sm:$0xff]
    %v279 = vld [vmem:[%s268 + $0x50] sm:$0xff]
    %v280 = vld [vmem:[%s268 + $0x58] sm:$0xff]
    %v281 = vld [vmem:[%s268 + $0x60] sm:$0xff]
    %v282 = vld [vmem:[%s268 + $0x68] sm:$0xff]
    %v283 = vld [vmem:[%s268 + $0x70] sm:$0xff]
    %v284 = vld [vmem:[%s268 + $0x78] sm:$0xff]
    %v285 = vlaneseq
    %v286 = vshrl.u32 %v285, 7
    %v287 = vsub.s32 1, %v286
    %v288 = vrot.slane %v261, %v287
    %289 = vmatprep.subr.mxu0 0.0
    %290 = vmatpush1.msra.mxu0 %v269
    %291 = vmatprep.subr.mxu0 0.0
    %292 = vmatpush1.msra.mxu0 %v270
    %293 = vmatprep.subr.mxu0 0.0
    %294 = vmatpush1.msra.mxu0 %v271
    %295 = vmatprep.subr.mxu0 0.0
    %296 = vmatpush1.msra.mxu0 %v272
    %297 = vmatprep.subr.mxu0 0.0
    %298 = vmatpush1.msra.mxu0 %v273
    %299 = vmatprep.subr.mxu0 0.0
    %300 = vmatpush1.msra.mxu0 %v274
    %301 = vmatprep.subr.mxu0 0.0
    %302 = vmatpush1.msra.mxu0 %v275
    %303 = vmatprep.subr.mxu0 0.0
    %304 = vmatpush1.msra.mxu0 %v276
    %305 = vmatprep.subr.mxu0 0.0
    %306 = vmatpush1.msra.mxu0 %v277
    %307 = vmatprep.subr.mxu0 0.0
    %308 = vmatpush1.msra.mxu0 %v278
    %309 = vmatprep.subr.mxu0 0.0
    %310 = vmatpush1.msra.mxu0 %v279
    %311 = vmatprep.subr.mxu0 0.0
    %312 = vmatpush1.msra.mxu0 %v280
    %313 = vmatprep.subr.mxu0 0.0
    %314 = vmatpush1.msra.mxu0 %v281
    %315 = vmatprep.subr.mxu0 0.0
    %316 = vmatpush1.msra.mxu0 %v282
    %317 = vmatprep.subr.mxu0 0.0
    %318 = vmatpush1.msra.mxu0 %v283
    %319 = vmatprep.subr.mxu0 0.0
    %320 = vmatpush1.msra.mxu0 %v284
    %321 = vmatprep.subr.mxu0 0.0
    %322 = vmatpush1.msra.mxu0 0.0
    %323 = vmatprep.subr.mxu0 0.0
    %324 = vmatpush1.msra.mxu0 0.0
    %325 = vmatprep.subr.mxu0 0.0
    %326 = vmatpush1.msra.mxu0 0.0
    %327 = vmatprep.subr.mxu0 0.0
    %328 = vmatpush1.msra.mxu0 0.0
    %329 = vmatprep.subr.mxu0 0.0
    %330 = vmatpush1.msra.mxu0 0.0
    %331 = vmatprep.subr.mxu0 0.0
    %332 = vmatpush1.msra.mxu0 0.0
    %333 = vmatprep.subr.mxu0 0.0
    %334 = vmatpush1.msra.mxu0 0.0
    %335 = vmatprep.subr.mxu0 0.0
    %336 = vmatpush1.msra.mxu0 0.0
    %337 = vmatprep.subr.mxu0 0.0
    %338 = vmatpush1.msra.mxu0 0.0
    %339 = vmatprep.subr.mxu0 0.0
    %340 = vmatpush1.msra.mxu0 0.0
    %341 = vmatprep.subr.mxu0 0.0
    %342 = vmatpush1.msra.mxu0 0.0
    %343 = vmatprep.subr.mxu0 0.0
    %344 = vmatpush1.msra.mxu0 0.0
    %345 = vmatprep.subr.mxu0 0.0
    %346 = vmatpush1.msra.mxu0 0.0
    %347 = vmatprep.subr.mxu0 0.0
    %348 = vmatpush1.msra.mxu0 0.0
    %349 = vmatprep.subr.mxu0 0.0
    %350 = vmatpush1.msra.mxu0 0.0
    %351 = vmatprep.subr.mxu0 0.0
    %352 = vmatpush1.msra.mxu0 0.0
    %353 = vmatprep.mubr.f32.mxu0 0.0
    %354 = vmatmul.mubr.f32.gmra.mrb[0].mxu0 %v267
    %v355 = vpop.f32.mrb[0].mxu0
    %v356 = vadd.f32 %v288, %v355
    %v357 = vpop.f32.mrb[0].mxu0
    %358 = vdwg.mxu0
    %v359 = vmax.f32 %v356, 0.0
    %v360 = vlaneseq
    %v361 = vshrl.u32 %v360, 7
    %v362 = vsub.s32 2, %v361
    %v363 = vrot.slane %v261, %v362
    %v364 = vmul.f32 %v359, %v363
    %365 = vadd.xlane.f32.xlu0 %v364
    %v366 = vpop.xlane.xlu0 %365
    %v367 = vlaneseq
    %v368 = vshrl.u32 %v367, 7
    %v369 = vsub.s32 3, %v368
    %v370 = vrot.slane %v261, %v369
    %v371 = vadd.f32 %v366, %v370
    %373 = vset.pattern.permute.xlu0 0
    %374 = vperm.xlu0 %373, %v371
    %v375 = vpop.permute.xlu0 %374
    %v376 = vlaneseq
    %v377 = vshrl.u32 %v376, 7
    %v378 = vsub.s32 %v252, %v377
    %v379 = vrot.slane %v375, %v378
    %381 = vst.msk [vmem:[#allocation8 + $0x1] sm:$0x1] %vm258, %v379
    // Predicated region
    $region30: #{tpu_custom_call.1} parent=1 // pred_check
      _
    $region31: #{tpu_custom_call.1} parent=1 // pred_check_branch
      %383 = sbr.rel (0) target = $region33
    $region32: #{tpu_custom_call.1} parent=1 // pred_region
      %s385 = ssub.s32 32, 32
      %386 = vsyncadd [#allocation4], %s385
      %s388 = sshll.u32 [#allocation8], 4
      %s389 = int_to_ptr.vmem [resolvable:$true] %s388
      %391 = dma.vmem_to_hbm [thread:$0]  %s389, 32, %s4, [#allocation4]
    $region33: #{tpu_custom_call.1} parent=1 // pred_fallthru
      _
    // Predicated region
    $region34: #{tpu_custom_call.1} parent=1 // pred_check
      _
    $region35: #{tpu_custom_call.1} parent=1 // pred_check_branch
      %393 = sbr.rel (0) target = $region37
    $region36: #{tpu_custom_call.1} parent=1 // pred_region
      %394 = dma.done [#allocation4], 32
    $region37: #{tpu_custom_call.1} parent=1 // pred_fallthru
      _
    %395 = vsyncpa [#allocation3], 1
    %396 = vsyncpa [#allocation6], 1
    %397 = vsyncpa [#allocation4], 1

</llo_original>
